<compile_context>
chip_gen: v6e
topology: v6e:2x2x1
jax: 0.10.0
libtpu: 0.0.40
codegen_flags: <defaults>
</compile_context>

<pallas_src>
import jax
import jax.numpy as jnp
from jax.experimental import pallas as pl
from jax.experimental.pallas import tpu as pltpu


# ----------------------------------------------------------------------------
# Kernels
# ----------------------------------------------------------------------------

def _make_fused_kernel(inv_t):
    """Single-pass kernel: squeeze + excite + scale for a block of Bt examples."""
    def kernel(x_ref, w1t_ref, b1_ref, w2t_ref, b2_ref, o_ref):
        # x block: (Bt, C, Tp).  Math in f32 (accuracy of the T reduction for
        # bf16 inputs; v5e has no bf16 VPU/EUP).
        xf = x_ref[...].astype(jnp.float32)
        s = jnp.sum(xf, axis=2) * inv_t                                   # (Bt, C)
        y = jnp.dot(s, w1t_ref[...],
                    preferred_element_type=jnp.float32) + b1_ref[...]     # (Bt, bneck)
        y = jnp.maximum(y, 0.0)                                           # ReLU
        z = jnp.dot(y, w2t_ref[...],
                    preferred_element_type=jnp.float32) + b2_ref[...]     # (Bt, C)
        g = jax.nn.sigmoid(z)                                             # (Bt, C)
        o_ref[...] = (xf * g[:, :, None]).astype(o_ref.dtype)
    return kernel


def _make_gate_kernel(inv_t):
    """Two-pass fallback, pass 1: accumulate the squeeze over T tiles, emit gate."""
    def kernel(x_ref, w1t_ref, b1_ref, w2t_ref, b2_ref, g_ref, acc_ref):
        t = pl.program_id(1)

        @pl.when(t == 0)
        def _():
            acc_ref[...] = jnp.zeros_like(acc_ref)

        acc_ref[...] += jnp.sum(x_ref[...].astype(jnp.float32), axis=2)   # (1, C)

        @pl.when(t == pl.num_programs(1) - 1)
        def _():
            s = acc_ref[...] * inv_t
            y = jnp.dot(s, w1t_ref[...],
                        preferred_element_type=jnp.float32) + b1_ref[...]
            y = jnp.maximum(y, 0.0)
            z = jnp.dot(y, w2t_ref[...],
                        preferred_element_type=jnp.float32) + b2_ref[...]
            # Gate stored as (1, C, 1): C on the sublane axis so pass 2 can
            # broadcast over the lane-dense T axis with no per-step relayout.
            g_ref[...] = jax.nn.sigmoid(z)[:, :, None]
    return kernel


def _scale_kernel(x_ref, g_ref, o_ref):
    """Two-pass fallback, pass 2: tiled broadcast-multiply by the gate."""
    o_ref[...] = (x_ref[...].astype(jnp.float32) * g_ref[...]).astype(o_ref.dtype)


# ----------------------------------------------------------------------------
# VMEM budgeting / block sizing
# ----------------------------------------------------------------------------

def _vmem_ceiling_bytes():
    try:
        phys = int(pltpu.get_tpu_info().vmem_capacity_bytes)
    except Exception:
        phys = 64 << 20                     # conservative: v7x per-TensorCore VMEM
    # Scoped limit = 3/4 of physical: ~96 MiB on 128-MiB v5e/v6e, ~48 MiB on v7x.
    return max(24 << 20, min((phys * 3) // 4, 96 << 20))


def _pick_block_batch(B, C, Tp, itemsize, budget_bytes, min_slab_bytes=1 << 20):
    """Examples per grid step for the fused kernel; 0 => fall back to two-pass."""
    per_ex_io = C * Tp * itemsize           # one HBM slab (x or out) per example
    # VMEM per example per step: x + out double-buffered (4 slabs) plus ~2
    # block-sized f32 temporaries for the f32 squeeze/scale math.
    per_ex_vmem = 4 * per_ex_io + 8 * C * Tp
    bt_cap = budget_bytes // per_ex_vmem
    if bt_cap < 1:
        return 0
    bt = int(min(B, bt_cap))
    # Keep >= 2 grid steps only when slabs stay >= ~1 MiB: dual-TC chips (v7x)
    # shard the "parallel" batch axis and >=2 steps overlaps DMA with the small
    # VPU/MXU work; on single-TC v5e/v6e splitting buys ~0%, so never shrink
    # slabs below the threshold just to split.
    if bt >= B and B >= 2 and (B // 2) * per_ex_io >= min_slab_bytes:
        bt = B // 2                          # exactly 2 (even) grid steps
    bt = max(1, bt)
    while B % bt:                            # largest divisor of B <= bt
        bt -= 1
    return bt


# ----------------------------------------------------------------------------
# pallas_call wrappers
# ----------------------------------------------------------------------------

def _se_fused(x_p, w1t, b1r, w2t, b2r, inv_t, bt, vmem_limit_bytes):
    B, C, Tp = x_p.shape
    bneck = w1t.shape[1]
    return pl.pallas_call(
        _make_fused_kernel(inv_t),
        out_shape=jax.ShapeDtypeStruct((B, C, Tp), x_p.dtype),
        grid_spec=pltpu.PrefetchScalarGridSpec(
            num_scalar_prefetch=0,
            grid=(B // bt,),
            in_specs=[
                pl.BlockSpec((bt, C, Tp), lambda i: (i, 0, 0)),   # x: Bt examples/step
                pl.BlockSpec((C, bneck), lambda i: (0, 0)),       # W1^T (VMEM-resident)
                pl.BlockSpec((1, bneck), lambda i: (0, 0)),       # b1 row
                pl.BlockSpec((bneck, C), lambda i: (0, 0)),       # W2^T (VMEM-resident)
                pl.BlockSpec((1, C), lambda i: (0, 0)),           # b2 row
            ],
            out_specs=pl.BlockSpec((bt, C, Tp), lambda i: (i, 0, 0)),
        ),
        compiler_params=pltpu.CompilerParams(
            dimension_semantics=("parallel",),
            vmem_limit_bytes=int(vmem_limit_bytes),
        ),
    )(x_p, w1t, b1r, w2t, b2r)


def _se_two_pass(x_p, w1t, b1r, w2t, b2r, inv_t, budget, vmem_limit_bytes):
    """Fallback when one (C, Tp) example does not fit the fused VMEM budget."""
    B, C, Tp = x_p.shape
    bneck = w1t.shape[1]
    itemsize = jnp.dtype(x_p.dtype).itemsize

    # Largest T tile (multiple of 128, dividing Tp) whose pass-2 working set
    # (x + out double-buffered + f32 temp) fits the budget.
    per_tile = lambda tt_: C * tt_ * (4 * itemsize + 4)
    n128 = Tp // 128
    tt = 0
    for k in range(n128, 0, -1):
        if n128 % k == 0 and per_tile(128 * k) <= budget:
            tt = 128 * k
            break
    if tt == 0:
        # TODO(synk): also tile the channel axis when a (C, 128) tile exceeds VMEM.
        raise NotImplementedError("SE two-pass fallback needs channel tiling for this shape")
    nt = Tp // tt

    gate = pl.pallas_call(
        _make_gate_kernel(inv_t),
        out_shape=jax.ShapeDtypeStruct((B, C, 1), jnp.float32),
        grid_spec=pltpu.PrefetchScalarGridSpec(
            num_scalar_prefetch=0,
            grid=(B, nt),
            in_specs=[
                pl.BlockSpec((1, C, tt), lambda b, t: (b, 0, t)),
                pl.BlockSpec((C, bneck), lambda b, t: (0, 0)),
                pl.BlockSpec((1, bneck), lambda b, t: (0, 0)),
                pl.BlockSpec((bneck, C), lambda b, t: (0, 0)),
                pl.BlockSpec((1, C), lambda b, t: (0, 0)),
            ],
            out_specs=pl.BlockSpec((1, C, 1), lambda b, t: (b, 0, 0)),
            scratch_shapes=[pltpu.VMEM((1, C), jnp.float32)],
        ),
        compiler_params=pltpu.CompilerParams(
            dimension_semantics=("parallel", "arbitrary"),
            vmem_limit_bytes=int(vmem_limit_bytes),
        ),
    )(x_p, w1t, b1r, w2t, b2r)

    return pl.pallas_call(
        _scale_kernel,
        out_shape=jax.ShapeDtypeStruct((B, C, Tp), x_p.dtype),
        grid_spec=pltpu.PrefetchScalarGridSpec(
            num_scalar_prefetch=0,
            grid=(B, nt),
            in_specs=[
                pl.BlockSpec((1, C, tt), lambda b, t: (b, 0, t)),
                pl.BlockSpec((1, C, 1), lambda b, t: (b, 0, 0)),
            ],
            out_specs=pl.BlockSpec((1, C, tt), lambda b, t: (b, 0, t)),
        ),
        compiler_params=pltpu.CompilerParams(
            dimension_semantics=("parallel", "parallel"),
            vmem_limit_bytes=int(vmem_limit_bytes),
        ),
    )(x_p, gate)


def se_module(x, w1, b1, w2, b2, *, block_batch=None, force_two_pass=False,
              vmem_limit_bytes=None):
    """SE block forward.

    x: (B, C, T) any float dtype.  w1: (bneck, C), b1: (bneck,), w2: (C, bneck),
    b2: (C,).  Returns x * sigmoid(W2 @ relu(W1 @ mean_T(x) + b1) + b2), same
    dtype as x.
    """
    B, C, T = x.shape
    bneck = w1.shape[0]
    itemsize = jnp.dtype(x.dtype).itemsize

    # Row-oriented f32 parameters, prepared ONCE on the host: no in-kernel
    # transposes, and all gate math stays in f32 (accuracy + v5e VPU).
    w1t = jnp.asarray(w1).T.astype(jnp.float32)           # (C, bneck)
    w2t = jnp.asarray(w2).T.astype(jnp.float32)           # (bneck, C)
    b1r = jnp.asarray(b1).reshape(1, bneck).astype(jnp.float32)
    b2r = jnp.asarray(b2).reshape(1, C).astype(jnp.float32)
    weight_bytes = 4 * (2 * C * bneck + bneck + C)

    # Lane-dense time axis: pad T to a multiple of 128 (zeros don't change the
    # sum; the mean divides by the real T), slice the pad off at the end.
    Tp = -(-T // 128) * 128
    x_p = jnp.pad(x, ((0, 0), (0, 0), (0, Tp - T))) if Tp != T else x
    inv_t = 1.0 / float(T)

    ceiling = _vmem_ceiling_bytes() if vmem_limit_bytes is None else int(vmem_limit_bytes)
    budget = max(ceiling - weight_bytes - (2 << 20), ceiling // 2)

    if block_batch is not None:
        bt = max(1, min(int(block_batch), B))
        while B % bt:                                      # clamp to a divisor of B
            bt -= 1
    else:
        bt = _pick_block_batch(B, C, Tp, itemsize, budget)

    if force_two_pass or bt == 0:
        out_p = _se_two_pass(x_p, w1t, b1r, w2t, b2r, inv_t, budget, ceiling)
    else:
        out_p = _se_fused(x_p, w1t, b1r, w2t, b2r, inv_t, bt, ceiling)

    return out_p if Tp == T else out_p[..., :T]


def se_module_ref(x, w1, b1, w2, b2):
    """Pure-JAX (f32) reference mirroring the PyTorch forward."""
    xf = x.astype(jnp.float32)
    s = jnp.mean(xf, axis=2, keepdims=True)                       # (B, C, 1)
    y = jnp.einsum("oc,bci->boi", w1, s) + b1[None, :, None]      # (B, bneck, 1)
    y = jnp.maximum(y, 0.0)
    z = jnp.einsum("co,boi->bci", w2, y) + b2[None, :, None]      # (B, C, 1)
    z = jax.nn.sigmoid(z)
    return xf * z


if __name__ == "__main__":
    B, C, T = 4, 64, 256          # small demo shapes; T is a multiple of 128
    bottleneck = 32

    key = jax.random.PRNGKey(0)
    kx, k1, k2, k3, k4 = jax.random.split(key, 5)

    x = jax.random.normal(kx, (B, C, T), dtype=jnp.float32)
    # Synthetic parameters (shapes match nn.Conv1d(C, bneck, 1) / (bneck, C, 1)).
    w1 = jax.random.normal(k1, (bottleneck, C), dtype=jnp.float32) * 0.1
    b1 = jax.random.normal(k2, (bottleneck,), dtype=jnp.float32) * 0.1
    w2 = jax.random.normal(k3, (C, bottleneck), dtype=jnp.float32) * 0.1
    b2 = jax.random.normal(k4, (C,), dtype=jnp.float32) * 0.1

    ref = se_module_ref(x, w1, b1, w2, b2)

    # 1) Fused single-pass path, f32.
    out = jax.block_until_ready(se_module(x, w1, b1, w2, b2))
    assert out.shape == (B, C, T)
    assert jnp.allclose(out, ref, atol=1e-5, rtol=1e-5)

    # 2) Two-pass fallback (forced) on the same inputs.
    out2 = jax.block_until_ready(se_module(x, w1, b1, w2, b2, force_two_pass=True))
    assert jnp.allclose(out2, ref, atol=1e-5, rtol=1e-5)

    # 3) bf16 I/O with a non-multiple-of-128 T (exercises host-side lane padding
    #    and the f32-math / downcast-on-store path).
    T3 = 200
    x3 = jax.random.normal(kx, (2, C, T3), dtype=jnp.float32).astype(jnp.bfloat16)
    out3 = jax.block_until_ready(se_module(x3, w1, b1, w2, b2))
    ref3 = se_module_ref(x3, w1, b1, w2, b2)
    assert out3.shape == (2, C, T3) and out3.dtype == jnp.bfloat16
    assert jnp.allclose(out3.astype(jnp.float32), ref3, atol=2e-2, rtol=2e-2)

    print("KERNEL_OK")
</pallas_src>

<mosaic_0001>
module attributes {stable_mosaic.version = 11 : i64} {
  func.func @kernel(%arg0: i32, %arg1: memref<4x64x256xf32, #tpu.memory_space<vmem>>, %arg2: memref<64x32xf32, #tpu.memory_space<vmem>>, %arg3: memref<1x32xf32, #tpu.memory_space<vmem>>, %arg4: memref<32x64xf32, #tpu.memory_space<vmem>>, %arg5: memref<1x64xf32, #tpu.memory_space<vmem>>, %arg6: memref<4x64x256xf32, #tpu.memory_space<vmem>>) attributes {dimension_semantics = [#tpu.dimension_semantics<parallel>], iteration_bounds = array<i64: 1>, scalar_prefetch = 0 : i64, scratch_operands = 0 : i64, tpu.core_type = #tpu.core_type<tc>, window_params = [{transform_indices = @transform_0, window_bounds = array<i64: 4, 64, 256>}, {pipeline_mode = #tpu.pipeline_mode<synchronous>, transform_indices = @transform_1, window_bounds = array<i64: 64, 32>}, {pipeline_mode = #tpu.pipeline_mode<synchronous>, transform_indices = @transform_2, window_bounds = array<i64: 1, 32>}, {pipeline_mode = #tpu.pipeline_mode<synchronous>, transform_indices = @transform_3, window_bounds = array<i64: 32, 64>}, {pipeline_mode = #tpu.pipeline_mode<synchronous>, transform_indices = @transform_4, window_bounds = array<i64: 1, 64>}, {transform_indices = @transform_5, window_bounds = array<i64: 4, 64, 256>}]} {
    %c0 = arith.constant 0 : index
    %c0_0 = arith.constant 0 : index
    %c0_1 = arith.constant 0 : index
    %0 = vector.load %arg1[%c0, %c0_0, %c0_1] : memref<4x64x256xf32, #tpu.memory_space<vmem>>, vector<4x64x256xf32>
    %cst = arith.constant dense<0.000000e+00> : vector<4x64xf32>
    %1 = vector.multi_reduction <add>, %0, %cst [2] : vector<4x64x256xf32> to vector<4x64xf32>
    %cst_2 = arith.constant 3.906250e-03 : f32
    %2 = vector.broadcast %cst_2 : f32 to vector<4x64xf32>
    %3 = arith.mulf %1, %2 : vector<4x64xf32>
    %c0_3 = arith.constant 0 : index
    %c0_4 = arith.constant 0 : index
    %4 = vector.load %arg2[%c0_3, %c0_4] : memref<64x32xf32, #tpu.memory_space<vmem>>, vector<64x32xf32>
    %cst_5 = arith.constant dense<0.000000e+00> : vector<4x32xf32>
    %5 = tpu.matmul %3, %4, %cst_5 {dimension_numbers = #tpu.dot_dimension_numbers<[1], [0], [0], [1], [0, 0, 1, 1], [], []>} : vector<4x64xf32>, vector<64x32xf32>, vector<4x32xf32> -> vector<4x32xf32>
    %c0_6 = arith.constant 0 : index
    %c0_7 = arith.constant 0 : index
    %6 = vector.load %arg3[%c0_6, %c0_7] : memref<1x32xf32, #tpu.memory_space<vmem>>, vector<1x32xf32>
    %7 = vector.broadcast %6 : vector<1x32xf32> to vector<4x32xf32>
    %8 = arith.addf %5, %7 : vector<4x32xf32>
    %cst_8 = arith.constant 0.000000e+00 : f32
    %9 = vector.broadcast %cst_8 : f32 to vector<4x32xf32>
    %10 = arith.maximumf %8, %9 : vector<4x32xf32>
    %c0_9 = arith.constant 0 : index
    %c0_10 = arith.constant 0 : index
    %11 = vector.load %arg4[%c0_9, %c0_10] : memref<32x64xf32, #tpu.memory_space<vmem>>, vector<32x64xf32>
    %cst_11 = arith.constant dense<0.000000e+00> : vector<4x64xf32>
    %12 = tpu.matmul %10, %11, %cst_11 {dimension_numbers = #tpu.dot_dimension_numbers<[1], [0], [0], [1], [0, 0, 1, 1], [], []>} : vector<4x32xf32>, vector<32x64xf32>, vector<4x64xf32> -> vector<4x64xf32>
    %c0_12 = arith.constant 0 : index
    %c0_13 = arith.constant 0 : index
    %13 = vector.load %arg5[%c0_12, %c0_13] : memref<1x64xf32, #tpu.memory_space<vmem>>, vector<1x64xf32>
    %14 = vector.broadcast %13 : vector<1x64xf32> to vector<4x64xf32>
    %15 = arith.addf %12, %14 : vector<4x64xf32>
    %16 = arith.negf %15 : vector<4x64xf32>
    %17 = math.exp %16 : vector<4x64xf32>
    %cst_14 = arith.constant 1.000000e+00 : f32
    %18 = vector.broadcast %cst_14 : f32 to vector<4x64xf32>
    %19 = arith.addf %18, %17 : vector<4x64xf32>
    %20 = arith.divf %18, %19 : vector<4x64xf32>
    %21 = vector.shape_cast %20 : vector<4x64xf32> to vector<4x64x1xf32>
    %22 = vector.broadcast %21 : vector<4x64x1xf32> to vector<4x64x256xf32>
    %23 = arith.mulf %0, %22 : vector<4x64x256xf32>
    %c0_15 = arith.constant 0 : index
    %c0_16 = arith.constant 0 : index
    %c0_17 = arith.constant 0 : index
    %24 = vector.load %arg6[%c0_15, %c0_16, %c0_17] : memref<4x64x256xf32, #tpu.memory_space<vmem>>, vector<4x64x256xf32>
    tpu.vector_store %arg6[%c0_15, %c0_16, %c0_17], %23 {strides = array<i32>} : memref<4x64x256xf32, #tpu.memory_space<vmem>>, vector<4x64x256xf32>,
    return
  }
  func.func @transform_0(%arg0: i32) -> (i32, i32, i32) {
    %c0_i32 = arith.constant 0 : i32
    %c0_i32_0 = arith.constant 0 : i32
    %c0_i32_1 = arith.constant 0 : i32
    return %arg0, %c0_i32, %c0_i32_0 : i32, i32, i32
  }
  func.func @transform_1(%arg0: i32) -> (i32, i32) {
    %c0_i32 = arith.constant 0 : i32
    %c0_i32_0 = arith.constant 0 : i32
    %c0_i32_1 = arith.constant 0 : i32
    return %c0_i32, %c0_i32_0 : i32, i32
  }
  func.func @transform_2(%arg0: i32) -> (i32, i32) {
    %c0_i32 = arith.constant 0 : i32
    %c0_i32_0 = arith.constant 0 : i32
    %c0_i32_1 = arith.constant 0 : i32
    return %c0_i32, %c0_i32_0 : i32, i32
  }
  func.func @transform_3(%arg0: i32) -> (i32, i32) {
    %c0_i32 = arith.constant 0 : i32
    %c0_i32_0 = arith.constant 0 : i32
    %c0_i32_1 = arith.constant 0 : i32
    return %c0_i32, %c0_i32_0 : i32, i32
  }
  func.func @transform_4(%arg0: i32) -> (i32, i32) {
    %c0_i32 = arith.constant 0 : i32
    %c0_i32_0 = arith.constant 0 : i32
    %c0_i32_1 = arith.constant 0 : i32
    return %c0_i32, %c0_i32_0 : i32, i32
  }
  func.func @transform_5(%arg0: i32) -> (i32, i32, i32) {
    %c0_i32 = arith.constant 0 : i32
    %c0_i32_0 = arith.constant 0 : i32
    %c0_i32_1 = arith.constant 0 : i32
    return %arg0, %c0_i32, %c0_i32_0 : i32, i32, i32
  }
}

</mosaic_0001>

<llo_original>
// kernel: tpu_custom_call.1
$region0: #{tpu_custom_call.1}
  #allocation0 [shape = 'u32[]', space=smem, size = 0x4, offset = 0x4, fixed_abs, tag = 'smem constant byte address 0x4 - core index']
  #allocation1 [shape = 'u32[144,128]{1,0:T(1,128)}', space=vmem, size = 0x12000, scoped, tag = 'internal scratch']
  %s0 = inlined_call_operand.hbm [shape: f32[4,64,256], index: 0, kind: input, shape index: {}]
  %s1 = inlined_call_operand.vmem [shape: f32[64,32], index: 1, kind: input, shape index: {}]
  %s2 = inlined_call_operand.vmem [shape: f32[1,32], index: 2, kind: input, shape index: {}]
  %s3 = inlined_call_operand.vmem [shape: f32[32,64], index: 3, kind: input, shape index: {}]
  %s4 = inlined_call_operand.vmem [shape: f32[1,64], index: 4, kind: input, shape index: {}]
  %s5 = inlined_call_operand.hbm [shape: f32[4,64,256], index: 5, kind: output, shape index: {}]
  %s6 = sld [smem:[#allocation0]]
  $region34: #{tpu_custom_call.1} parent=0
    _
  %s8 = ssub.s32 1, %s6
  %s9 = scalar_select 0, %s8, %s6
  $region1: #{tpu_custom_call.1} parent=0
    #allocation2 [shape = 'u8[262144]{0}', space=vmem, size = 0x40000, scoped, tag = 'input window, operand 0, single buffered']
    #allocation3 [shape = 's32[1]{0}', space=sflag, size = 0x4, scoped, tag = 'scoped memory for tpu_custom_call.1']
    #allocation4 [shape = 's32[1]{0}', space=sflag, size = 0x4, scoped, tag = 'scoped memory for tpu_custom_call.1']
    #allocation5 [shape = 'u8[262144]{0}', space=vmem, size = 0x40000, scoped, tag = 'output window, operand 0, single buffered']
    %10 = vsyncpa [#allocation3], 0
    %11 = vsyncpa [#allocation4], 0
    // Predicated region
    $region2: #{tpu_custom_call.1} parent=1 // pred_check
      _
    $region3: #{tpu_custom_call.1} parent=1 // pred_check_branch
      %13 = sbr.rel (0) target = $region5
    $region4: #{tpu_custom_call.1} parent=1 // pred_region
      %s15 = ssub.s32 8192, 8192
      %16 = vsyncadd [#allocation3], %s15
      %s17 = sshll.u32 [#allocation2], 4
      %s18 = int_to_ptr.vmem [resolvable:$true] %s17
      %23 = dma.hbm_to_vmem [thread:$0]  %s0, 8192, %s18, [#allocation3], 256, 256, 16
    $region5: #{tpu_custom_call.1} parent=1 // pred_fallthru
      _
    // Predicated region
    $region6: #{tpu_custom_call.1} parent=1 // pred_check
      _
    $region7: #{tpu_custom_call.1} parent=1 // pred_check_branch
      %25 = sbr.rel (0) target = $region9
    $region8: #{tpu_custom_call.1} parent=1 // pred_region
      _
    $region9: #{tpu_custom_call.1} parent=1 // pred_fallthru
      _
    // Predicated region
    $region10: #{tpu_custom_call.1} parent=1 // pred_check
      _
    $region11: #{tpu_custom_call.1} parent=1 // pred_check_branch
      %27 = sbr.rel (0) target = $region13
    $region12: #{tpu_custom_call.1} parent=1 // pred_region
      _
    $region13: #{tpu_custom_call.1} parent=1 // pred_fallthru
      _
    // Predicated region
    $region14: #{tpu_custom_call.1} parent=1 // pred_check
      _
    $region15: #{tpu_custom_call.1} parent=1 // pred_check_branch
      %29 = sbr.rel (0) target = $region17
    $region16: #{tpu_custom_call.1} parent=1 // pred_region
      _
    $region17: #{tpu_custom_call.1} parent=1 // pred_fallthru
      _
    // Predicated region
    $region18: #{tpu_custom_call.1} parent=1 // pred_check
      _
    $region19: #{tpu_custom_call.1} parent=1 // pred_check_branch
      %31 = sbr.rel (0) target = $region21
    $region20: #{tpu_custom_call.1} parent=1 // pred_region
      _
    $region21: #{tpu_custom_call.1} parent=1 // pred_fallthru
      _
    // Predicated region
    $region22: #{tpu_custom_call.1} parent=1 // pred_check
      _
    $region23: #{tpu_custom_call.1} parent=1 // pred_check_branch
      %33 = sbr.rel (0) target = $region25
    $region24: #{tpu_custom_call.1} parent=1 // pred_region
      %34 = dma.done [#allocation3], 8192
    $region25: #{tpu_custom_call.1} parent=1 // pred_fallthru
      _
    %v35 = vld [vmem:[#allocation2] sm:$0xff]
    %v36 = vld [vmem:[#allocation2 + $0x8] sm:$0xff]
    %v37 = vld [vmem:[#allocation2 + $0x10] sm:$0xff]
    %v38 = vld [vmem:[#allocation2 + $0x18] sm:$0xff]
    %v39 = vld [vmem:[#allocation2 + $0x20] sm:$0xff]
    %v40 = vld [vmem:[#allocation2 + $0x28] sm:$0xff]
    %v41 = vld [vmem:[#allocation2 + $0x30] sm:$0xff]
    %v42 = vld [vmem:[#allocation2 + $0x38] sm:$0xff]
    %v43 = vld [vmem:[#allocation2 + $0x40] sm:$0xff]
    %v44 = vld [vmem:[#allocation2 + $0x48] sm:$0xff]
    %v45 = vld [vmem:[#allocation2 + $0x50] sm:$0xff]
    %v46 = vld [vmem:[#allocation2 + $0x58] sm:$0xff]
    %v47 = vld [vmem:[#allocation2 + $0x60] sm:$0xff]
    %v48 = vld [vmem:[#allocation2 + $0x68] sm:$0xff]
    %v49 = vld [vmem:[#allocation2 + $0x70] sm:$0xff]
    %v50 = vld [vmem:[#allocation2 + $0x78] sm:$0xff]
    %v51 = vld [vmem:[#allocation2 + $0x80] sm:$0xff]
    %v52 = vld [vmem:[#allocation2 + $0x88] sm:$0xff]
    %v53 = vld [vmem:[#allocation2 + $0x90] sm:$0xff]
    %v54 = vld [vmem:[#allocation2 + $0x98] sm:$0xff]
    %v55 = vld [vmem:[#allocation2 + $0xa0] sm:$0xff]
    %v56 = vld [vmem:[#allocation2 + $0xa8] sm:$0xff]
    %v57 = vld [vmem:[#allocation2 + $0xb0] sm:$0xff]
    %v58 = vld [vmem:[#allocation2 + $0xb8] sm:$0xff]
    %v59 = vld [vmem:[#allocation2 + $0xc0] sm:$0xff]
    %v60 = vld [vmem:[#allocation2 + $0xc8] sm:$0xff]
    %v61 = vld [vmem:[#allocation2 + $0xd0] sm:$0xff]
    %v62 = vld [vmem:[#allocation2 + $0xd8] sm:$0xff]
    %v63 = vld [vmem:[#allocation2 + $0xe0] sm:$0xff]
    %v64 = vld [vmem:[#allocation2 + $0xe8] sm:$0xff]
    %v65 = vld [vmem:[#allocation2 + $0xf0] sm:$0xff]
    %v66 = vld [vmem:[#allocation2 + $0xf8] sm:$0xff]
    %v67 = vld [vmem:[#allocation2 + $0x100] sm:$0xff]
    %v68 = vld [vmem:[#allocation2 + $0x108] sm:$0xff]
    %v69 = vld [vmem:[#allocation2 + $0x110] sm:$0xff]
    %v70 = vld [vmem:[#allocation2 + $0x118] sm:$0xff]
    %v71 = vld [vmem:[#allocation2 + $0x120] sm:$0xff]
    %v72 = vld [vmem:[#allocation2 + $0x128] sm:$0xff]
    %v73 = vld [vmem:[#allocation2 + $0x130] sm:$0xff]
    %v74 = vld [vmem:[#allocation2 + $0x138] sm:$0xff]
    %v75 = vld [vmem:[#allocation2 + $0x140] sm:$0xff]
    %v76 = vld [vmem:[#allocation2 + $0x148] sm:$0xff]
    %v77 = vld [vmem:[#allocation2 + $0x150] sm:$0xff]
    %v78 = vld [vmem:[#allocation2 + $0x158] sm:$0xff]
    %v79 = vld [vmem:[#allocation2 + $0x160] sm:$0xff]
    %v80 = vld [vmem:[#allocation2 + $0x168] sm:$0xff]
    %v81 = vld [vmem:[#allocation2 + $0x170] sm:$0xff]
    %v82 = vld [vmem:[#allocation2 + $0x178] sm:$0xff]
    %v83 = vld [vmem:[#allocation2 + $0x180] sm:$0xff]
    %v84 = vld [vmem:[#allocation2 + $0x188] sm:$0xff]
    %v85 = vld [vmem:[#allocation2 + $0x190] sm:$0xff]
    %v86 = vld [vmem:[#allocation2 + $0x198] sm:$0xff]
    %v87 = vld [vmem:[#allocation2 + $0x1a0] sm:$0xff]
    %v88 = vld [vmem:[#allocation2 + $0x1a8] sm:$0xff]
    %v89 = vld [vmem:[#allocation2 + $0x1b0] sm:$0xff]
    %v90 = vld [vmem:[#allocation2 + $0x1b8] sm:$0xff]
    %v91 = vld [vmem:[#allocation2 + $0x1c0] sm:$0xff]
    %v92 = vld [vmem:[#allocation2 + $0x1c8] sm:$0xff]
    %v93 = vld [vmem:[#allocation2 + $0x1d0] sm:$0xff]
    %v94 = vld [vmem:[#allocation2 + $0x1d8] sm:$0xff]
    %v95 = vld [vmem:[#allocation2 + $0x1e0] sm:$0xff]
    %v96 = vld [vmem:[#allocation2 + $0x1e8] sm:$0xff]
    %v97 = vld [vmem:[#allocation2 + $0x1f0] sm:$0xff]
    %v98 = vld [vmem:[#allocation2 + $0x1f8] sm:$0xff]
    %v99 = vadd.f32 %v35, %v36
    %100 = vadd.xlane.f32.xlu0 %v99
    %v101 = vpop.xlane.xlu0 %100
    %v102 = vadd.f32 %v37, %v38
    %103 = vadd.xlane.f32.xlu0 %v102
    %v104 = vpop.xlane.xlu0 %103
    %v105 = vadd.f32 %v39, %v40
    %106 = vadd.xlane.f32.xlu0 %v105
    %v107 = vpop.xlane.xlu0 %106
    %v108 = vadd.f32 %v41, %v42
    %109 = vadd.xlane.f32.xlu0 %v108
    %v110 = vpop.xlane.xlu0 %109
    %v111 = vadd.f32 %v43, %v44
    %112 = vadd.xlane.f32.xlu0 %v111
    %v113 = vpop.xlane.xlu0 %112
    %v114 = vadd.f32 %v45, %v46
    %115 = vadd.xlane.f32.xlu0 %v114
    %v116 = vpop.xlane.xlu0 %115
    %v117 = vadd.f32 %v47, %v48
    %118 = vadd.xlane.f32.xlu0 %v117
    %v119 = vpop.xlane.xlu0 %118
    %v120 = vadd.f32 %v49, %v50
    %121 = vadd.xlane.f32.xlu0 %v120
    %v122 = vpop.xlane.xlu0 %121
    %v123 = vadd.f32 %v51, %v52
    %124 = vadd.xlane.f32.xlu0 %v123
    %v125 = vpop.xlane.xlu0 %124
    %v126 = vadd.f32 %v53, %v54
    %127 = vadd.xlane.f32.xlu0 %v126
    %v128 = vpop.xlane.xlu0 %127
    %v129 = vadd.f32 %v55, %v56
    %130 = vadd.xlane.f32.xlu0 %v129
    %v131 = vpop.xlane.xlu0 %130
    %v132 = vadd.f32 %v57, %v58
    %133 = vadd.xlane.f32.xlu0 %v132
    %v134 = vpop.xlane.xlu0 %133
    %v135 = vadd.f32 %v59, %v60
    %136 = vadd.xlane.f32.xlu0 %v135
    %v137 = vpop.xlane.xlu0 %136
    %v138 = vadd.f32 %v61, %v62
    %139 = vadd.xlane.f32.xlu0 %v138
    %v140 = vpop.xlane.xlu0 %139
    %v141 = vadd.f32 %v63, %v64
    %142 = vadd.xlane.f32.xlu0 %v141
    %v143 = vpop.xlane.xlu0 %142
    %v144 = vadd.f32 %v65, %v66
    %145 = vadd.xlane.f32.xlu0 %v144
    %v146 = vpop.xlane.xlu0 %145
    %v147 = vadd.f32 %v67, %v68
    %148 = vadd.xlane.f32.xlu0 %v147
    %v149 = vpop.xlane.xlu0 %148
    %v150 = vadd.f32 %v69, %v70
    %151 = vadd.xlane.f32.xlu0 %v150
    %v152 = vpop.xlane.xlu0 %151
    %v153 = vadd.f32 %v71, %v72
    %154 = vadd.xlane.f32.xlu0 %v153
    %v155 = vpop.xlane.xlu0 %154
    %v156 = vadd.f32 %v73, %v74
    %157 = vadd.xlane.f32.xlu0 %v156
    %v158 = vpop.xlane.xlu0 %157
    %v159 = vadd.f32 %v75, %v76
    %160 = vadd.xlane.f32.xlu0 %v159
    %v161 = vpop.xlane.xlu0 %160
    %v162 = vadd.f32 %v77, %v78
    %163 = vadd.xlane.f32.xlu0 %v162
    %v164 = vpop.xlane.xlu0 %163
    %v165 = vadd.f32 %v79, %v80
    %166 = vadd.xlane.f32.xlu0 %v165
    %v167 = vpop.xlane.xlu0 %166
    %v168 = vadd.f32 %v81, %v82
    %169 = vadd.xlane.f32.xlu0 %v168
    %v170 = vpop.xlane.xlu0 %169
    %v171 = vadd.f32 %v83, %v84
    %172 = vadd.xlane.f32.xlu0 %v171
    %v173 = vpop.xlane.xlu0 %172
    %v174 = vadd.f32 %v85, %v86
    %175 = vadd.xlane.f32.xlu0 %v174
    %v176 = vpop.xlane.xlu0 %175
    %v177 = vadd.f32 %v87, %v88
    %178 = vadd.xlane.f32.xlu0 %v177
    %v179 = vpop.xlane.xlu0 %178
    %v180 = vadd.f32 %v89, %v90
    %181 = vadd.xlane.f32.xlu0 %v180
    %v182 = vpop.xlane.xlu0 %181
    %v183 = vadd.f32 %v91, %v92
    %184 = vadd.xlane.f32.xlu0 %v183
    %v185 = vpop.xlane.xlu0 %184
    %v186 = vadd.f32 %v93, %v94
    %187 = vadd.xlane.f32.xlu0 %v186
    %v188 = vpop.xlane.xlu0 %187
    %v189 = vadd.f32 %v95, %v96
    %190 = vadd.xlane.f32.xlu0 %v189
    %v191 = vpop.xlane.xlu0 %190
    %v192 = vadd.f32 %v97, %v98
    %193 = vadd.xlane.f32.xlu0 %v192
    %v194 = vpop.xlane.xlu0 %193
    %v195 = vmul.f32 %v101, 0.00390625
    %v196 = vmul.f32 %v104, 0.00390625
    %v197 = vmul.f32 %v107, 0.00390625
    %v198 = vmul.f32 %v110, 0.00390625
    %v199 = vmul.f32 %v113, 0.00390625
    %v200 = vmul.f32 %v116, 0.00390625
    %v201 = vmul.f32 %v119, 0.00390625
    %v202 = vmul.f32 %v122, 0.00390625
    %v203 = vmul.f32 %v125, 0.00390625
    %v204 = vmul.f32 %v128, 0.00390625
    %v205 = vmul.f32 %v131, 0.00390625
    %v206 = vmul.f32 %v134, 0.00390625
    %v207 = vmul.f32 %v137, 0.00390625
    %v208 = vmul.f32 %v140, 0.00390625
    %v209 = vmul.f32 %v143, 0.00390625
    %v210 = vmul.f32 %v146, 0.00390625
    %v211 = vmul.f32 %v149, 0.00390625
    %v212 = vmul.f32 %v152, 0.00390625
    %v213 = vmul.f32 %v155, 0.00390625
    %v214 = vmul.f32 %v158, 0.00390625
    %v215 = vmul.f32 %v161, 0.00390625
    %v216 = vmul.f32 %v164, 0.00390625
    %v217 = vmul.f32 %v167, 0.00390625
    %v218 = vmul.f32 %v170, 0.00390625
    %v219 = vmul.f32 %v173, 0.00390625
    %v220 = vmul.f32 %v176, 0.00390625
    %v221 = vmul.f32 %v179, 0.00390625
    %v222 = vmul.f32 %v182, 0.00390625
    %v223 = vmul.f32 %v185, 0.00390625
    %v224 = vmul.f32 %v188, 0.00390625
    %v225 = vmul.f32 %v191, 0.00390625
    %v226 = vmul.f32 %v194, 0.00390625
    %v227 = vld [vmem:[%s1] sm:$0xff]
    %v228 = vld [vmem:[%s1 + $0x8] sm:$0xff]
    %v229 = vld [vmem:[%s1 + $0x10] sm:$0xff]
    %v230 = vld [vmem:[%s1 + $0x18] sm:$0xff]
    %v231 = vld [vmem:[%s1 + $0x20] sm:$0xff]
    %v232 = vld [vmem:[%s1 + $0x28] sm:$0xff]
    %v233 = vld [vmem:[%s1 + $0x30] sm:$0xff]
    %v234 = vld [vmem:[%s1 + $0x38] sm:$0xff]
    %v235 = vld [vmem:[%s2] sm:$0x1]
    %v237 = vlaneseq
    %v238 = vshrl.u32 %v237, 7
    %v239 = vsub.s32 0, %v238
    %v240 = vrot.slane %v235, %v239
    %v274 = vlaneseq
    %v275 = vand.u32 %v274, 127
    %v276 = vlaneseq
    %v277 = vshrl.u32 %v276, 7
    %v278 = vsub.s32 %v275, %v277
    %v279 = vrot.slane %v195, %v278
    %v280 = vadd.s32 %v275, 4294967288
    %v281 = vlaneseq
    %v282 = vshrl.u32 %v281, 7
    %v283 = vsub.s32 %v280, %v282
    %v284 = vrot.slane %v196, %v283
    %vm285 = vcmask 130112
    %v286 = vsel %vm285, %v284, %v279
    %v287 = vadd.s32 %v275, 4294967280
    %v288 = vlaneseq
    %v289 = vshrl.u32 %v288, 7
    %v290 = vsub.s32 %v287, %v289
    %v291 = vrot.slane %v197, %v290
    %vm292 = vcmask 195712
    %v293 = vsel %vm292, %v291, %v286
    %v294 = vadd.s32 %v275, 4294967272
    %v295 = vlaneseq
    %v296 = vshrl.u32 %v295, 7
    %v297 = vsub.s32 %v294, %v296
    %v298 = vrot.slane %v198, %v297
    %vm299 = vcmask 261312
    %v300 = vsel %vm299, %v298, %v293
    %v301 = vadd.s32 %v275, 4294967264
    %v302 = vlaneseq
    %v303 = vshrl.u32 %v302, 7
    %v304 = vsub.s32 %v301, %v303
    %v305 = vrot.slane %v199, %v304
    %vm306 = vcmask 326912
    %v307 = vsel %vm306, %v305, %v300
    %v308 = vadd.s32 %v275, 4294967256
    %v309 = vlaneseq
    %v310 = vshrl.u32 %v309, 7
    %v311 = vsub.s32 %v308, %v310
    %v312 = vrot.slane %v200, %v311
    %vm313 = vcmask 392512
    %v314 = vsel %vm313, %v312, %v307
    %v315 = vadd.s32 %v275, 4294967248
    %v316 = vlaneseq
    %v317 = vshrl.u32 %v316, 7
    %v318 = vsub.s32 %v315, %v317
    %v319 = vrot.slane %v201, %v318
    %vm320 = vcmask 458112
    %v321 = vsel %vm320, %v319, %v314
    %v322 = vadd.s32 %v275, 4294967240
    %v323 = vlaneseq
    %v324 = vshrl.u32 %v323, 7
    %v325 = vsub.s32 %v322, %v324
    %v326 = vrot.slane %v202, %v325
    %vm327 = vcmask 523712
    %v328 = vsel %vm327, %v326, %v321
    %v329 = vlaneseq
    %v330 = vshrl.u32 %v329, 7
    %v331 = vsub.s32 %v275, %v330
    %v332 = vrot.slane %v203, %v331
    %v333 = vlaneseq
    %v334 = vshrl.u32 %v333, 7
    %v335 = vsub.s32 %v280, %v334
    %v336 = vrot.slane %v204, %v335
    %v337 = vsel %vm285, %v336, %v332
    %v338 = vlaneseq
    %v339 = vshrl.u32 %v338, 7
    %v340 = vsub.s32 %v287, %v339
    %v341 = vrot.slane %v205, %v340
    %v342 = vsel %vm292, %v341, %v337
    %v343 = vlaneseq
    %v344 = vshrl.u32 %v343, 7
    %v345 = vsub.s32 %v294, %v344
    %v346 = vrot.slane %v206, %v345
    %v347 = vsel %vm299, %v346, %v342
    %v348 = vlaneseq
    %v349 = vshrl.u32 %v348, 7
    %v350 = vsub.s32 %v301, %v349
    %v351 = vrot.slane %v207, %v350
    %v352 = vsel %vm306, %v351, %v347
    %v353 = vlaneseq
    %v354 = vshrl.u32 %v353, 7
    %v355 = vsub.s32 %v308, %v354
    %v356 = vrot.slane %v208, %v355
    %v357 = vsel %vm313, %v356, %v352
    %v358 = vlaneseq
    %v359 = vshrl.u32 %v358, 7
    %v360 = vsub.s32 %v315, %v359
    %v361 = vrot.slane %v209, %v360
    %v362 = vsel %vm320, %v361, %v357
    %v363 = vlaneseq
    %v364 = vshrl.u32 %v363, 7
    %v365 = vsub.s32 %v322, %v364
    %v366 = vrot.slane %v210, %v365
    %v367 = vsel %vm327, %v366, %v362
    %v368 = vlaneseq
    %v369 = vshrl.u32 %v368, 7
    %v370 = vsub.s32 %v275, %v369
    %v371 = vrot.slane %v211, %v370
    %v372 = vlaneseq
    %v373 = vshrl.u32 %v372, 7
    %v374 = vsub.s32 %v280, %v373
    %v375 = vrot.slane %v212, %v374
    %v376 = vsel %vm285, %v375, %v371
    %v377 = vlaneseq
    %v378 = vshrl.u32 %v377, 7
    %v379 = vsub.s32 %v287, %v378
    %v380 = vrot.slane %v213, %v379
    %v381 = vsel %vm292, %v380, %v376
    %v382 = vlaneseq
    %v383 = vshrl.u32 %v382, 7
    %v384 = vsub.s32 %v294, %v383
    %v385 = vrot.slane %v214, %v384
    %v386 = vsel %vm299, %v385, %v381
    %v387 = vlaneseq
    %v388 = vshrl.u32 %v387, 7
    %v389 = vsub.s32 %v301, %v388
    %v390 = vrot.slane %v215, %v389
    %v391 = vsel %vm306, %v390, %v386
    %v392 = vlaneseq
    %v393 = vshrl.u32 %v392, 7
    %v394 = vsub.s32 %v308, %v393
    %v395 = vrot.slane %v216, %v394
    %v396 = vsel %vm313, %v395, %v391
    %v397 = vlaneseq
    %v398 = vshrl.u32 %v397, 7
    %v399 = vsub.s32 %v315, %v398
    %v400 = vrot.slane %v217, %v399
    %v401 = vsel %vm320, %v400, %v396
    %v402 = vlaneseq
    %v403 = vshrl.u32 %v402, 7
    %v404 = vsub.s32 %v322, %v403
    %v405 = vrot.slane %v218, %v404
    %v406 = vsel %vm327, %v405, %v401
    %v407 = vlaneseq
    %v408 = vshrl.u32 %v407, 7
    %v409 = vsub.s32 %v275, %v408
    %v410 = vrot.slane %v219, %v409
    %v411 = vlaneseq
    %v412 = vshrl.u32 %v411, 7
    %v413 = vsub.s32 %v280, %v412
    %v414 = vrot.slane %v220, %v413
    %v415 = vsel %vm285, %v414, %v410
    %v416 = vlaneseq
    %v417 = vshrl.u32 %v416, 7
    %v418 = vsub.s32 %v287, %v417
    %v419 = vrot.slane %v221, %v418
    %v420 = vsel %vm292, %v419, %v415
    %v421 = vlaneseq
    %v422 = vshrl.u32 %v421, 7
    %v423 = vsub.s32 %v294, %v422
    %v424 = vrot.slane %v222, %v423
    %v425 = vsel %vm299, %v424, %v420
    %v426 = vlaneseq
    %v427 = vshrl.u32 %v426, 7
    %v428 = vsub.s32 %v301, %v427
    %v429 = vrot.slane %v223, %v428
    %v430 = vsel %vm306, %v429, %v425
    %v431 = vlaneseq
    %v432 = vshrl.u32 %v431, 7
    %v433 = vsub.s32 %v308, %v432
    %v434 = vrot.slane %v224, %v433
    %v435 = vsel %vm313, %v434, %v430
    %v436 = vlaneseq
    %v437 = vshrl.u32 %v436, 7
    %v438 = vsub.s32 %v315, %v437
    %v439 = vrot.slane %v225, %v438
    %v440 = vsel %vm320, %v439, %v435
    %v441 = vlaneseq
    %v442 = vshrl.u32 %v441, 7
    %v443 = vsub.s32 %v322, %v442
    %v444 = vrot.slane %v226, %v443
    %v445 = vsel %vm327, %v444, %v440
    %vm446 = vcmask 1041409
    %v447 = vsel %vm446, %v367, %v328
    %vm448 = vcmask 1042434
    %v449 = vsel %vm448, %v406, %v447
    %vm450 = vcmask 1043459
    %v451 = vsel %vm450, %v445, %v449
    %vm452 = vcmask 523264
    %v453 = vsel %vm452, %v451, 0
    %455 = vmatprep.subr.mxu0 0.0
    %456 = vmatpush1.msra.mxu0 0.0
    %457 = vmatprep.subr.mxu0 0.0
    %458 = vmatpush1.msra.mxu0 0.0
    %459 = vmatprep.subr.mxu0 0.0
    %460 = vmatpush1.msra.mxu0 0.0
    %461 = vmatprep.subr.mxu0 0.0
    %462 = vmatpush1.msra.mxu0 0.0
    %463 = vmatprep.subr.mxu0 0.0
    %464 = vmatpush1.msra.mxu0 0.0
    %465 = vmatprep.subr.mxu0 0.0
    %466 = vmatpush1.msra.mxu0 0.0
    %467 = vmatprep.subr.mxu0 0.0
    %468 = vmatpush1.msra.mxu0 0.0
    %469 = vmatprep.subr.mxu0 0.0
    %470 = vmatpush1.msra.mxu0 0.0
    %471 = vmatprep.subr.mxu0 0.0
    %472 = vmatpush1.msra.mxu0 %v234
    %473 = vmatprep.subr.mxu0 0.0
    %474 = vmatpush1.msra.mxu0 %v233
    %475 = vmatprep.subr.mxu0 0.0
    %476 = vmatpush1.msra.mxu0 %v232
    %477 = vmatprep.subr.mxu0 0.0
    %478 = vmatpush1.msra.mxu0 %v231
    %479 = vmatprep.subr.mxu0 0.0
    %480 = vmatpush1.msra.mxu0 %v230
    %481 = vmatprep.subr.mxu0 0.0
    %482 = vmatpush1.msra.mxu0 %v229
    %483 = vmatprep.subr.mxu0 0.0
    %484 = vmatpush1.msra.mxu0 %v228
    %485 = vmatprep.subr.mxu0 0.0
    %486 = vmatpush1.msra.mxu0 %v227
    %487 = vmatprep.subr.mxu0 0.0
    %488 = vmatpush2.msra.mxu0 0.0
    %489 = vmatprep.subr.mxu0 0.0
    %490 = vmatpush2.msra.mxu0 0.0
    %491 = vmatprep.subr.mxu0 0.0
    %492 = vmatpush2.msra.mxu0 0.0
    %493 = vmatprep.subr.mxu0 0.0
    %494 = vmatpush2.msra.mxu0 0.0
    %495 = vmatprep.subr.mxu0 0.0
    %496 = vmatpush2.msra.mxu0 0.0
    %497 = vmatprep.subr.mxu0 0.0
    %498 = vmatpush2.msra.mxu0 0.0
    %499 = vmatprep.subr.mxu0 0.0
    %500 = vmatpush2.msra.mxu0 0.0
    %501 = vmatprep.subr.mxu0 0.0
    %502 = vmatpush2.msra.mxu0 0.0
    %503 = vmatprep.subr.mxu0 0.0
    %504 = vmatpush2.msra.mxu0 0.0
    %505 = vmatprep.subr.mxu0 0.0
    %506 = vmatpush2.msra.mxu0 0.0
    %507 = vmatprep.subr.mxu0 0.0
    %508 = vmatpush2.msra.mxu0 0.0
    %509 = vmatprep.subr.mxu0 0.0
    %510 = vmatpush2.msra.mxu0 0.0
    %511 = vmatprep.subr.mxu0 0.0
    %512 = vmatpush2.msra.mxu0 0.0
    %513 = vmatprep.subr.mxu0 0.0
    %514 = vmatpush2.msra.mxu0 0.0
    %515 = vmatprep.subr.mxu0 0.0
    %516 = vmatpush2.msra.mxu0 0.0
    %517 = vmatprep.subr.mxu0 0.0
    %518 = vmatpush2.msra.mxu0 0.0
    %519 = vmatprep.mubr.f32.mxu0 0.0
    %520 = vmatmul.mubr.f32.gmra.mxu0 %v453
    %v521 = vpop.f32.mrf.mxu0
    %v522 = vadd.f32 %v240, %v521
    %v523 = vpop.f32.mrf.mxu0
    %524 = vdwg.mxu0
    %v525 = vmax.f32 %v522, 0.0
    %v526 = vld [vmem:[%s3] sm:$0xff]
    %v527 = vld [vmem:[%s3 + $0x8] sm:$0xff]
    %v528 = vld [vmem:[%s3 + $0x10] sm:$0xff]
    %v529 = vld [vmem:[%s3 + $0x18] sm:$0xff]
    %v530 = vld [vmem:[%s4] sm:$0x1]
    %v532 = vlaneseq
    %v533 = vshrl.u32 %v532, 7
    %v534 = vsub.s32 0, %v533
    %v535 = vrot.slane %v530, %v534
    %vm537 = vcmask 261120
    %v539 = vsel %vm537, %v525, 0
    %541 = vmatprep.subr.mxu0 0.0
    %542 = vmatpush1.msra.mxu0 0.0
    %543 = vmatprep.subr.mxu0 0.0
    %544 = vmatpush1.msra.mxu0 0.0
    %545 = vmatprep.subr.mxu0 0.0
    %546 = vmatpush1.msra.mxu0 0.0
    %547 = vmatprep.subr.mxu0 0.0
    %548 = vmatpush1.msra.mxu0 0.0
    %549 = vmatprep.subr.mxu0 0.0
    %550 = vmatpush1.msra.mxu0 0.0
    %551 = vmatprep.subr.mxu0 0.0
    %552 = vmatpush1.msra.mxu0 0.0
    %553 = vmatprep.subr.mxu0 0.0
    %554 = vmatpush1.msra.mxu0 0.0
    %555 = vmatprep.subr.mxu0 0.0
    %556 = vmatpush1.msra.mxu0 0.0
    %557 = vmatprep.subr.mxu0 0.0
    %558 = vmatpush1.msra.mxu0 0.0
    %559 = vmatprep.subr.mxu0 0.0
    %560 = vmatpush1.msra.mxu0 0.0
    %561 = vmatprep.subr.mxu0 0.0
    %562 = vmatpush1.msra.mxu0 0.0
    %563 = vmatprep.subr.mxu0 0.0
    %564 = vmatpush1.msra.mxu0 0.0
    %565 = vmatprep.subr.mxu0 0.0
    %566 = vmatpush1.msra.mxu0 %v529
    %567 = vmatprep.subr.mxu0 0.0
    %568 = vmatpush1.msra.mxu0 %v528
    %569 = vmatprep.subr.mxu0 0.0
    %570 = vmatpush1.msra.mxu0 %v527
    %571 = vmatprep.subr.mxu0 0.0
    %572 = vmatpush1.msra.mxu0 %v526
    %573 = vmatprep.subr.mxu0 0.0
    %574 = vmatpush2.msra.mxu0 0.0
    %575 = vmatprep.subr.mxu0 0.0
    %576 = vmatpush2.msra.mxu0 0.0
    %577 = vmatprep.subr.mxu0 0.0
    %578 = vmatpush2.msra.mxu0 0.0
    %579 = vmatprep.subr.mxu0 0.0
    %580 = vmatpush2.msra.mxu0 0.0
    %581 = vmatprep.subr.mxu0 0.0
    %582 = vmatpush2.msra.mxu0 0.0
    %583 = vmatprep.subr.mxu0 0.0
    %584 = vmatpush2.msra.mxu0 0.0
    %585 = vmatprep.subr.mxu0 0.0
    %586 = vmatpush2.msra.mxu0 0.0
    %587 = vmatprep.subr.mxu0 0.0
    %588 = vmatpush2.msra.mxu0 0.0
    %589 = vmatprep.subr.mxu0 0.0
    %590 = vmatpush2.msra.mxu0 0.0
    %591 = vmatprep.subr.mxu0 0.0
    %592 = vmatpush2.msra.mxu0 0.0
    %593 = vmatprep.subr.mxu0 0.0
    %594 = vmatpush2.msra.mxu0 0.0
    %595 = vmatprep.subr.mxu0 0.0
    %596 = vmatpush2.msra.mxu0 0.0
    %597 = vmatprep.subr.mxu0 0.0
    %598 = vmatpush2.msra.mxu0 0.0
    %599 = vmatprep.subr.mxu0 0.0
    %600 = vmatpush2.msra.mxu0 0.0
    %601 = vmatprep.subr.mxu0 0.0
    %602 = vmatpush2.msra.mxu0 0.0
    %603 = vmatprep.subr.mxu0 0.0
    %604 = vmatpush2.msra.mxu0 0.0
    %605 = vmatprep.mubr.f32.mxu0 0.0
    %606 = vmatmul.mubr.f32.gmra.mxu0 %v539
    %v607 = vpop.f32.mrf.mxu0
    %v608 = vadd.f32 %v535, %v607
    %v609 = vpop.f32.mrf.mxu0
    %610 = vdwg.mxu0
    %v611 = vxor.u32 %v608, 2147483648
    %v612 = vmul.f32 %v611, 1.442695
    %v613 = vpow.pop %v612
    %v614 = vadd.f32 %v613, 1.0
    %v615 = vrcp.pop %v614
    %v616 = vmul.f32 1.0, %v615
    %v617 = vlaneseq
    %v618 = vshrl.u32 %v617, 7
    %v619 = vsub.s32 0, %v618
    %v620 = vrot.slane %v616, %v619
    %622 = vbcast.lane.b32.xlu0 %v620, 256
    %v623 = vpop.permute.xlu0 %622
    %s625 = sor.u32 256, 8
    %626 = vbcast.lane.b32.xlu0 %v620, %s625
    %v627 = vpop.permute.xlu0 %626
    %s629 = sor.u32 256, 16
    %630 = vbcast.lane.b32.xlu0 %v620, %s629
    %v631 = vpop.permute.xlu0 %630
    %s633 = sor.u32 256, 24
    %634 = vbcast.lane.b32.xlu0 %v620, %s633
    %v635 = vpop.permute.xlu0 %634
    %s637 = sor.u32 256, 32
    %638 = vbcast.lane.b32.xlu0 %v620, %s637
    %v639 = vpop.permute.xlu0 %638
    %s641 = sor.u32 256, 40
    %642 = vbcast.lane.b32.xlu0 %v620, %s641
    %v643 = vpop.permute.xlu0 %642
    %s645 = sor.u32 256, 48
    %646 = vbcast.lane.b32.xlu0 %v620, %s645
    %v647 = vpop.permute.xlu0 %646
    %s649 = sor.u32 256, 56
    %650 = vbcast.lane.b32.xlu0 %v620, %s649
    %v651 = vpop.permute.xlu0 %650
    %v652 = vlaneseq
    %v653 = vshrl.u32 %v652, 7
    %v654 = vsub.s32 1, %v653
    %v655 = vrot.slane %v616, %v654
    %657 = vbcast.lane.b32.xlu0 %v655, 256
    %v658 = vpop.permute.xlu0 %657
    %s660 = sor.u32 256, 8
    %661 = vbcast.lane.b32.xlu0 %v655, %s660
    %v662 = vpop.permute.xlu0 %661
    %s664 = sor.u32 256, 16
    %665 = vbcast.lane.b32.xlu0 %v655, %s664
    %v666 = vpop.permute.xlu0 %665
    %s668 = sor.u32 256, 24
    %669 = vbcast.lane.b32.xlu0 %v655, %s668
    %v670 = vpop.permute.xlu0 %669
    %s672 = sor.u32 256, 32
    %673 = vbcast.lane.b32.xlu0 %v655, %s672
    %v674 = vpop.permute.xlu0 %673
    %s676 = sor.u32 256, 40
    %677 = vbcast.lane.b32.xlu0 %v655, %s676
    %v678 = vpop.permute.xlu0 %677
    %s680 = sor.u32 256, 48
    %681 = vbcast.lane.b32.xlu0 %v655, %s680
    %v682 = vpop.permute.xlu0 %681
    %s684 = sor.u32 256, 56
    %685 = vbcast.lane.b32.xlu0 %v655, %s684
    %v686 = vpop.permute.xlu0 %685
    %v687 = vlaneseq
    %v688 = vshrl.u32 %v687, 7
    %v689 = vsub.s32 2, %v688
    %v690 = vrot.slane %v616, %v689
    %692 = vbcast.lane.b32.xlu0 %v690, 256
    %v693 = vpop.permute.xlu0 %692
    %s695 = sor.u32 256, 8
    %696 = vbcast.lane.b32.xlu0 %v690, %s695
    %v697 = vpop.permute.xlu0 %696
    %s699 = sor.u32 256, 16
    %700 = vbcast.lane.b32.xlu0 %v690, %s699
    %v701 = vpop.permute.xlu0 %700
    %s703 = sor.u32 256, 24
    %704 = vbcast.lane.b32.xlu0 %v690, %s703
    %v705 = vpop.permute.xlu0 %704
    %s707 = sor.u32 256, 32
    %708 = vbcast.lane.b32.xlu0 %v690, %s707
    %v709 = vpop.permute.xlu0 %708
    %s711 = sor.u32 256, 40
    %712 = vbcast.lane.b32.xlu0 %v690, %s711
    %v713 = vpop.permute.xlu0 %712
    %s715 = sor.u32 256, 48
    %716 = vbcast.lane.b32.xlu0 %v690, %s715
    %v717 = vpop.permute.xlu0 %716
    %s719 = sor.u32 256, 56
    %720 = vbcast.lane.b32.xlu0 %v690, %s719
    %v721 = vpop.permute.xlu0 %720
    %v722 = vlaneseq
    %v723 = vshrl.u32 %v722, 7
    %v724 = vsub.s32 3, %v723
    %v725 = vrot.slane %v616, %v724
    %727 = vbcast.lane.b32.xlu0 %v725, 256
    %v728 = vpop.permute.xlu0 %727
    %s730 = sor.u32 256, 8
    %731 = vbcast.lane.b32.xlu0 %v725, %s730
    %v732 = vpop.permute.xlu0 %731
    %s734 = sor.u32 256, 16
    %735 = vbcast.lane.b32.xlu0 %v725, %s734
    %v736 = vpop.permute.xlu0 %735
    %s738 = sor.u32 256, 24
    %739 = vbcast.lane.b32.xlu0 %v725, %s738
    %v740 = vpop.permute.xlu0 %739
    %s742 = sor.u32 256, 32
    %743 = vbcast.lane.b32.xlu0 %v725, %s742
    %v744 = vpop.permute.xlu0 %743
    %s746 = sor.u32 256, 40
    %747 = vbcast.lane.b32.xlu0 %v725, %s746
    %v748 = vpop.permute.xlu0 %747
    %s750 = sor.u32 256, 48
    %751 = vbcast.lane.b32.xlu0 %v725, %s750
    %v752 = vpop.permute.xlu0 %751
    %s754 = sor.u32 256, 56
    %755 = vbcast.lane.b32.xlu0 %v725, %s754
    %v756 = vpop.permute.xlu0 %755
    %v757 = vmul.f32 %v35, %v623
    %v758 = vmul.f32 %v36, %v623
    %v759 = vmul.f32 %v37, %v627
    %v760 = vmul.f32 %v38, %v627
    %v761 = vmul.f32 %v39, %v631
    %v762 = vmul.f32 %v40, %v631
    %v763 = vmul.f32 %v41, %v635
    %v764 = vmul.f32 %v42, %v635
    %v765 = vmul.f32 %v43, %v639
    %v766 = vmul.f32 %v44, %v639
    %v767 = vmul.f32 %v45, %v643
    %v768 = vmul.f32 %v46, %v643
    %v769 = vmul.f32 %v47, %v647
    %v770 = vmul.f32 %v48, %v647
    %v771 = vmul.f32 %v49, %v651
    %v772 = vmul.f32 %v50, %v651
    %v773 = vmul.f32 %v51, %v658
    %v774 = vmul.f32 %v52, %v658
    %v775 = vmul.f32 %v53, %v662
    %v776 = vmul.f32 %v54, %v662
    %v777 = vmul.f32 %v55, %v666
    %v778 = vmul.f32 %v56, %v666
    %v779 = vmul.f32 %v57, %v670
    %v780 = vmul.f32 %v58, %v670
    %v781 = vmul.f32 %v59, %v674
    %v782 = vmul.f32 %v60, %v674
    %v783 = vmul.f32 %v61, %v678
    %v784 = vmul.f32 %v62, %v678
    %v785 = vmul.f32 %v63, %v682
    %v786 = vmul.f32 %v64, %v682
    %v787 = vmul.f32 %v65, %v686
    %v788 = vmul.f32 %v66, %v686
    %v789 = vmul.f32 %v67, %v693
    %v790 = vmul.f32 %v68, %v693
    %v791 = vmul.f32 %v69, %v697
    %v792 = vmul.f32 %v70, %v697
    %v793 = vmul.f32 %v71, %v701
    %v794 = vmul.f32 %v72, %v701
    %v795 = vmul.f32 %v73, %v705
    %v796 = vmul.f32 %v74, %v705
    %v797 = vmul.f32 %v75, %v709
    %v798 = vmul.f32 %v76, %v709
    %v799 = vmul.f32 %v77, %v713
    %v800 = vmul.f32 %v78, %v713
    %v801 = vmul.f32 %v79, %v717
    %v802 = vmul.f32 %v80, %v717
    %v803 = vmul.f32 %v81, %v721
    %v804 = vmul.f32 %v82, %v721
    %v805 = vmul.f32 %v83, %v728
    %v806 = vmul.f32 %v84, %v728
    %v807 = vmul.f32 %v85, %v732
    %v808 = vmul.f32 %v86, %v732
    %v809 = vmul.f32 %v87, %v736
    %v810 = vmul.f32 %v88, %v736
    %v811 = vmul.f32 %v89, %v740
    %v812 = vmul.f32 %v90, %v740
    %v813 = vmul.f32 %v91, %v744
    %v814 = vmul.f32 %v92, %v744
    %v815 = vmul.f32 %v93, %v748
    %v816 = vmul.f32 %v94, %v748
    %v817 = vmul.f32 %v95, %v752
    %v818 = vmul.f32 %v96, %v752
    %v819 = vmul.f32 %v97, %v756
    %v820 = vmul.f32 %v98, %v756
    %821 = vst [vmem:[#allocation5] sm:$0xff] %v757
    %822 = vst [vmem:[#allocation5 + $0x8] sm:$0xff] %v758
    %823 = vst [vmem:[#allocation5 + $0x10] sm:$0xff] %v759
    %824 = vst [vmem:[#allocation5 + $0x18] sm:$0xff] %v760
    %825 = vst [vmem:[#allocation5 + $0x20] sm:$0xff] %v761
    %826 = vst [vmem:[#allocation5 + $0x28] sm:$0xff] %v762
    %827 = vst [vmem:[#allocation5 + $0x30] sm:$0xff] %v763
    %828 = vst [vmem:[#allocation5 + $0x38] sm:$0xff] %v764
    %829 = vst [vmem:[#allocation5 + $0x40] sm:$0xff] %v765
    %830 = vst [vmem:[#allocation5 + $0x48] sm:$0xff] %v766
    %831 = vst [vmem:[#allocation5 + $0x50] sm:$0xff] %v767
    %832 = vst [vmem:[#allocation5 + $0x58] sm:$0xff] %v768
    %833 = vst [vmem:[#allocation5 + $0x60] sm:$0xff] %v769
    %834 = vst [vmem:[#allocation5 + $0x68] sm:$0xff] %v770
    %835 = vst [vmem:[#allocation5 + $0x70] sm:$0xff] %v771
    %836 = vst [vmem:[#allocation5 + $0x78] sm:$0xff] %v772
    %837 = vst [vmem:[#allocation5 + $0x80] sm:$0xff] %v773
    %838 = vst [vmem:[#allocation5 + $0x88] sm:$0xff] %v774
    %839 = vst [vmem:[#allocation5 + $0x90] sm:$0xff] %v775
    %840 = vst [vmem:[#allocation5 + $0x98] sm:$0xff] %v776
    %841 = vst [vmem:[#allocation5 + $0xa0] sm:$0xff] %v777
    %842 = vst [vmem:[#allocation5 + $0xa8] sm:$0xff] %v778
    %843 = vst [vmem:[#allocation5 + $0xb0] sm:$0xff] %v779
    %844 = vst [vmem:[#allocation5 + $0xb8] sm:$0xff] %v780
    %845 = vst [vmem:[#allocation5 + $0xc0] sm:$0xff] %v781
    %846 = vst [vmem:[#allocation5 + $0xc8] sm:$0xff] %v782
    %847 = vst [vmem:[#allocation5 + $0xd0] sm:$0xff] %v783
    %848 = vst [vmem:[#allocation5 + $0xd8] sm:$0xff] %v784
    %849 = vst [vmem:[#allocation5 + $0xe0] sm:$0xff] %v785
    %850 = vst [vmem:[#allocation5 + $0xe8] sm:$0xff] %v786
    %851 = vst [vmem:[#allocation5 + $0xf0] sm:$0xff] %v787
    %852 = vst [vmem:[#allocation5 + $0xf8] sm:$0xff] %v788
    %853 = vst [vmem:[#allocation5 + $0x100] sm:$0xff] %v789
    %854 = vst [vmem:[#allocation5 + $0x108] sm:$0xff] %v790
    %855 = vst [vmem:[#allocation5 + $0x110] sm:$0xff] %v791
    %856 = vst [vmem:[#allocation5 + $0x118] sm:$0xff] %v792
    %857 = vst [vmem:[#allocation5 + $0x120] sm:$0xff] %v793
    %858 = vst [vmem:[#allocation5 + $0x128] sm:$0xff] %v794
    %859 = vst [vmem:[#allocation5 + $0x130] sm:$0xff] %v795
    %860 = vst [vmem:[#allocation5 + $0x138] sm:$0xff] %v796
    %861 = vst [vmem:[#allocation5 + $0x140] sm:$0xff] %v797
    %862 = vst [vmem:[#allocation5 + $0x148] sm:$0xff] %v798
    %863 = vst [vmem:[#allocation5 + $0x150] sm:$0xff] %v799
    %864 = vst [vmem:[#allocation5 + $0x158] sm:$0xff] %v800
    %865 = vst [vmem:[#allocation5 + $0x160] sm:$0xff] %v801
    %866 = vst [vmem:[#allocation5 + $0x168] sm:$0xff] %v802
    %867 = vst [vmem:[#allocation5 + $0x170] sm:$0xff] %v803
    %868 = vst [vmem:[#allocation5 + $0x178] sm:$0xff] %v804
    %869 = vst [vmem:[#allocation5 + $0x180] sm:$0xff] %v805
    %870 = vst [vmem:[#allocation5 + $0x188] sm:$0xff] %v806
    %871 = vst [vmem:[#allocation5 + $0x190] sm:$0xff] %v807
    %872 = vst [vmem:[#allocation5 + $0x198] sm:$0xff] %v808
    %873 = vst [vmem:[#allocation5 + $0x1a0] sm:$0xff] %v809
    %874 = vst [vmem:[#allocation5 + $0x1a8] sm:$0xff] %v810
    %875 = vst [vmem:[#allocation5 + $0x1b0] sm:$0xff] %v811
    %876 = vst [vmem:[#allocation5 + $0x1b8] sm:$0xff] %v812
    %877 = vst [vmem:[#allocation5 + $0x1c0] sm:$0xff] %v813
    %878 = vst [vmem:[#allocation5 + $0x1c8] sm:$0xff] %v814
    %879 = vst [vmem:[#allocation5 + $0x1d0] sm:$0xff] %v815
    %880 = vst [vmem:[#allocation5 + $0x1d8] sm:$0xff] %v816
    %881 = vst [vmem:[#allocation5 + $0x1e0] sm:$0xff] %v817
    %882 = vst [vmem:[#allocation5 + $0x1e8] sm:$0xff] %v818
    %883 = vst [vmem:[#allocation5 + $0x1f0] sm:$0xff] %v819
    %884 = vst [vmem:[#allocation5 + $0x1f8] sm:$0xff] %v820
    // Predicated region
    $region26: #{tpu_custom_call.1} parent=1 // pred_check
      _
    $region27: #{tpu_custom_call.1} parent=1 // pred_check_branch
      %886 = sbr.rel (0) target = $region29
    $region28: #{tpu_custom_call.1} parent=1 // pred_region
      %s888 = ssub.s32 8192, 8192
      %889 = vsyncadd [#allocation4], %s888
      %s890 = sshll.u32 [#allocation5], 4
      %s891 = int_to_ptr.vmem [resolvable:$true] %s890
      %896 = dma.vmem_to_hbm [thread:$0]  %s891, 8192, %s5, [#allocation4], 256, 256, 16
    $region29: #{tpu_custom_call.1} parent=1 // pred_fallthru
      _
    // Predicated region
    $region30: #{tpu_custom_call.1} parent=1 // pred_check
      _
    $region31: #{tpu_custom_call.1} parent=1 // pred_check_branch
      %898 = sbr.rel (0) target = $region33
    $region32: #{tpu_custom_call.1} parent=1 // pred_region
      %899 = dma.done [#allocation4], 8192
    $region33: #{tpu_custom_call.1} parent=1 // pred_fallthru
      _
    %900 = vsyncpa [#allocation3], 1
    %901 = vsyncpa [#allocation4], 1

</llo_original>
